<compile_context>
chip_gen: v5e
topology: v5e:2x2
jax: 0.10.0
libtpu: 0.0.40
codegen_flags: <defaults>
</compile_context>

<pallas_src>
import numpy as np
import jax
import jax.numpy as jnp
from jax.experimental import pallas as pl
from jax.experimental.pallas import tpu as pltpu


# ------------------------------- kernels ----------------------------------- #

def _gather_permute_kernel(perm_ref, x_ref, o_ref):
    """out[b, j] = x[b, perm[j]] via a lane gather (pure data movement)."""
    # perm_ref: (1, C) int32, resident across the grid; x_ref/o_ref: (TM, C).
    idx = jnp.broadcast_to(perm_ref[...], x_ref.shape)      # cheap sublane bcast
    o_ref[...] = jnp.take_along_axis(
        x_ref[...], idx, axis=1, mode="promise_in_bounds")


def _matmul_permute_kernel(p_ref, x_ref, o_ref):
    """Fallback: out = x @ P with bf16 one-hot P (exact, cast up before dot)."""
    o_ref[...] = jnp.dot(
        x_ref[...],
        p_ref[...].astype(x_ref.dtype),            # bf16 -> x dtype, exact 0/1
        preferred_element_type=jnp.float32,
    ).astype(o_ref.dtype)


# ------------------------------ wrappers ------------------------------------ #

def _batch_tile(b, c, itemsize):
    # Aim for ~2 MiB per (TM, C) block; with x/out each double-buffered this
    # keeps the pipeline well inside the default scoped VMEM on v5e/v6e/v7x.
    cap = (2 * 1024 * 1024) // max(1, c * itemsize)
    cap = max(8, min(512, (cap // 8) * 8))
    return b if b <= cap else cap                  # full-dim block or 8-multiple


def _permute_gather(x, perm_i32):
    b, c = x.shape
    tm = _batch_tile(b, c, x.dtype.itemsize)
    return pl.pallas_call(
        _gather_permute_kernel,
        out_shape=jax.ShapeDtypeStruct((b, c), x.dtype),
        grid=(pl.cdiv(b, tm),),
        in_specs=[
            pl.BlockSpec((1, c), lambda i: (0, 0)),     # perm: resident
            pl.BlockSpec((tm, c), lambda i: (i, 0)),    # x batch tile
        ],
        out_specs=pl.BlockSpec((tm, c), lambda i: (i, 0)),
        compiler_params=pltpu.CompilerParams(
            dimension_semantics=("parallel",)),
        cost_estimate=pl.CostEstimate(
            flops=0, transcendentals=0,
            bytes_accessed=2 * b * c * x.dtype.itemsize + c * 4),
    )(perm_i32, x)


def _permute_matmul(x, pmat_bf16):
    b, c = x.shape
    tm = _batch_tile(b, c, x.dtype.itemsize)
    return pl.pallas_call(
        _matmul_permute_kernel,
        out_shape=jax.ShapeDtypeStruct((b, c), x.dtype),
        grid=(pl.cdiv(b, tm),),
        in_specs=[
            pl.BlockSpec((c, c), lambda i: (0, 0)),     # P: weight-stationary
            pl.BlockSpec((tm, c), lambda i: (i, 0)),
        ],
        out_specs=pl.BlockSpec((tm, c), lambda i: (i, 0)),
        compiler_params=pltpu.CompilerParams(
            dimension_semantics=("parallel",)),
        cost_estimate=pl.CostEstimate(
            flops=2 * b * c * c, transcendentals=0,
            bytes_accessed=2 * b * c * x.dtype.itemsize + c * c * 2),
    )(pmat_bf16, x)


class PermuteRandom:
    """Permutes the channel axis of a [B, C] input in a random but fixed way."""

    def __init__(self, dims_in, seed):
        self.in_channels = int(dims_in[0][0])
        rng = np.random.RandomState(seed)              # deterministic, in-script
        self.perm = rng.permutation(self.in_channels)
        self.perm_inv = np.zeros_like(self.perm)
        for i, p in enumerate(self.perm):
            self.perm_inv[p] = i

        c = self.in_channels
        # Gather path: permutation as (1, C) int32, VMEM-resident in the kernel.
        self._perm_i32 = jnp.asarray(self.perm.reshape(1, c), dtype=jnp.int32)
        self._perm_inv_i32 = jnp.asarray(self.perm_inv.reshape(1, c), dtype=jnp.int32)
        # Fallback path: bf16 one-hot matrices (exact for 0/1, half the footprint).
        eye = np.eye(c, dtype=np.float32)
        self._P = jnp.asarray(eye[:, self.perm], dtype=jnp.bfloat16)
        self._P_inv = jnp.asarray(eye[:, self.perm_inv], dtype=jnp.bfloat16)

        self._use_gather = None   # decided on first call (per backend support)

    def _permute(self, x, rev):
        perm = self._perm_inv_i32 if rev else self._perm_i32
        pmat = self._P_inv if rev else self._P
        if self._use_gather is not False:
            try:
                out = _permute_gather(x, perm)
                self._use_gather = True
                return out
            except Exception:
                # Lane gather not lowerable for this config -> one-hot matmul.
                self._use_gather = False
        return _permute_matmul(x, pmat)

    def forward(self, x, rev=False):
        # x is a list with one [B, C] array, matching the PyTorch API.
        return [self._permute(x[0], rev)]

    def jacobian(self, x, rev=False):
        return 0.0

    def jacobian_diag(self, x, rev=False):
        return jnp.ones_like(x[0]).reshape(x[0].shape[0], -1)

    def output_dims(self, input_dims):
        assert len(input_dims) == 1, "Can only use 1 input"
        return input_dims


if __name__ == "__main__":
    B, C = 8, 32
    key = jax.random.PRNGKey(0)
    x = jax.random.normal(key, (B, C), dtype=jnp.float32)

    mod = PermuteRandom(dims_in=[(C,)], seed=0)

    y = jax.block_until_ready(mod.forward([x])[0])
    x_back = jax.block_until_ready(mod.forward([y], rev=True)[0])

    y_ref = np.asarray(x)[:, mod.perm]
    assert np.allclose(np.asarray(y), y_ref, atol=1e-6)
    assert np.allclose(np.asarray(x_back), np.asarray(x), atol=1e-6)

    print("KERNEL_OK")
</pallas_src>

<mosaic_0001>
module attributes {stable_mosaic.version = 11 : i64} {
  func.func @_gather_permute_kernel(%arg0: i32, %arg1: memref<1x32xi32, #tpu.memory_space<vmem>>, %arg2: memref<8x32xf32, #tpu.memory_space<vmem>>, %arg3: memref<8x32xf32, #tpu.memory_space<vmem>>) attributes {dimension_semantics = [#tpu.dimension_semantics<parallel>], iteration_bounds = array<i64: 1>, scalar_prefetch = 0 : i64, scratch_operands = 0 : i64, tpu.core_type = #tpu.core_type<tc>, window_params = [{pipeline_mode = #tpu.pipeline_mode<synchronous>, transform_indices = @transform_0, window_bounds = array<i64: 1, 32>}, {transform_indices = @transform_1, window_bounds = array<i64: 8, 32>}, {transform_indices = @transform_2, window_bounds = array<i64: 8, 32>}]} {
    %c0 = arith.constant 0 : index
    %c0_0 = arith.constant 0 : index
    %0 = vector.load %arg1[%c0, %c0_0] : memref<1x32xi32, #tpu.memory_space<vmem>>, vector<1x32xi32>
    %1 = vector.shape_cast %0 : vector<1x32xi32> to vector<1x32xi32>
    %2 = vector.broadcast %1 : vector<1x32xi32> to vector<8x32xi32>
    %c0_1 = arith.constant 0 : index
    %c0_2 = arith.constant 0 : index
    %3 = vector.load %arg2[%c0_1, %c0_2] : memref<8x32xf32, #tpu.memory_space<vmem>>, vector<8x32xf32>
    %4 = vector.shape_cast %2 : vector<8x32xi32> to vector<8x32x1xi32>
    %5 = vector.shape_cast %4 : vector<8x32x1xi32> to vector<8x32xi32>
    %6 = tpu.dynamic_gather %3[%5] in [1] : vector<8x32xf32>, vector<8x32xi32> -> vector<8x32xf32>
    %c0_3 = arith.constant 0 : index
    %c0_4 = arith.constant 0 : index
    %7 = vector.load %arg3[%c0_3, %c0_4] : memref<8x32xf32, #tpu.memory_space<vmem>>, vector<8x32xf32>
    tpu.vector_store %arg3[%c0_3, %c0_4], %6 {strides = array<i32>} : memref<8x32xf32, #tpu.memory_space<vmem>>, vector<8x32xf32>,
    return
  }
  func.func @transform_0(%arg0: i32) -> (i32, i32) {
    %c0_i32 = arith.constant 0 : i32
    %c0_i32_0 = arith.constant 0 : i32
    %c0_i32_1 = arith.constant 0 : i32
    return %c0_i32, %c0_i32_0 : i32, i32
  }
  func.func @transform_1(%arg0: i32) -> (i32, i32) {
    %c0_i32 = arith.constant 0 : i32
    %c0_i32_0 = arith.constant 0 : i32
    return %arg0, %c0_i32 : i32, i32
  }
  func.func @transform_2(%arg0: i32) -> (i32, i32) {
    %c0_i32 = arith.constant 0 : i32
    %c0_i32_0 = arith.constant 0 : i32
    return %arg0, %c0_i32 : i32, i32
  }
}

module attributes {stable_mosaic.version = 11 : i64} {
  func.func @_matmul_permute_kernel(%arg0: i32, %arg1: memref<32x32xbf16, #tpu.memory_space<vmem>>, %arg2: memref<8x32xf32, #tpu.memory_space<vmem>>, %arg3: memref<8x32xf32, #tpu.memory_space<vmem>>) attributes {dimension_semantics = [#tpu.dimension_semantics<parallel>], iteration_bounds = array<i64: 1>, scalar_prefetch = 0 : i64, scratch_operands = 0 : i64, tpu.core_type = #tpu.core_type<tc>, window_params = [{pipeline_mode = #tpu.pipeline_mode<synchronous>, transform_indices = @transform_0, window_bounds = array<i64: 32, 32>}, {transform_indices = @transform_1, window_bounds = array<i64: 8, 32>}, {transform_indices = @transform_2, window_bounds = array<i64: 8, 32>}]} {
    %c0 = arith.constant 0 : index
    %c0_0 = arith.constant 0 : index
    %0 = vector.load %arg2[%c0, %c0_0] : memref<8x32xf32, #tpu.memory_space<vmem>>, vector<8x32xf32>
    %c0_1 = arith.constant 0 : index
    %c0_2 = arith.constant 0 : index
    %1 = vector.load %arg1[%c0_1, %c0_2] : memref<32x32xbf16, #tpu.memory_space<vmem>>, vector<32x32xbf16>
    %2 = arith.extf %1 : vector<32x32xbf16> to vector<32x32xf32>
    %cst = arith.constant dense<0.000000e+00> : vector<8x32xf32>
    %3 = tpu.matmul %0, %2, %cst {dimension_numbers = #tpu.dot_dimension_numbers<[1], [0], [0], [1], [0, 0, 1, 1], [], []>} : vector<8x32xf32>, vector<32x32xf32>, vector<8x32xf32> -> vector<8x32xf32>
    %c0_3 = arith.constant 0 : index
    %c0_4 = arith.constant 0 : index
    %4 = vector.load %arg3[%c0_3, %c0_4] : memref<8x32xf32, #tpu.memory_space<vmem>>, vector<8x32xf32>
    tpu.vector_store %arg3[%c0_3, %c0_4], %3 {strides = array<i32>} : memref<8x32xf32, #tpu.memory_space<vmem>>, vector<8x32xf32>,
    return
  }
  func.func @transform_0(%arg0: i32) -> (i32, i32) {
    %c0_i32 = arith.constant 0 : i32
    %c0_i32_0 = arith.constant 0 : i32
    %c0_i32_1 = arith.constant 0 : i32
    return %c0_i32, %c0_i32_0 : i32, i32
  }
  func.func @transform_1(%arg0: i32) -> (i32, i32) {
    %c0_i32 = arith.constant 0 : i32
    %c0_i32_0 = arith.constant 0 : i32
    return %arg0, %c0_i32 : i32, i32
  }
  func.func @transform_2(%arg0: i32) -> (i32, i32) {
    %c0_i32 = arith.constant 0 : i32
    %c0_i32_0 = arith.constant 0 : i32
    return %arg0, %c0_i32 : i32, i32
  }
}

</mosaic_0001>

<llo_original>
// kernel: tpu_custom_call.1
$region0: #{tpu_custom_call.1}
  #allocation0 [shape = 'u32[]', space=smem, size = 0x4, offset = 0x4, fixed_abs, tag = 'smem constant byte address 0x4 - core index']
  #allocation1 [shape = 'u32[72,128]{1,0:T(1,128)}', space=vmem, size = 0x9000, scoped, tag = 'internal scratch']
  %s0 = inlined_call_operand.hbm [shape: s32[1,32], index: 0, kind: input, shape index: {}]
  %s1 = inlined_call_operand.hbm [shape: f32[8,32], index: 1, kind: input, shape index: {}]
  %s2 = inlined_call_operand.hbm [shape: f32[8,32], index: 2, kind: output, shape index: {}]
  %s3 = sld [smem:[#allocation0]]
  $region26: #{tpu_custom_call.1} parent=0
    _
  %s5 = ssub.s32 1, %s3
  %s6 = scalar_select 0, %s5, %s3
  $region1: #{tpu_custom_call.1} parent=0
    #allocation2 [shape = 'u8[512]{0}', space=vmem, size = 0x400, scoped, tag = 'input window, operand 0, single buffered']
    #allocation3 [shape = 's32[1]{0}', space=sflag, size = 0x4, scoped, tag = 'scoped memory for tpu_custom_call.1']
    #allocation4 [shape = 's32[1]{0}', space=sflag, size = 0x4, scoped, tag = 'scoped memory for tpu_custom_call.1']
    #allocation5 [shape = 'u8[4096]{0}', space=vmem, size = 0x1000, scoped, tag = 'input window, operand 1, single buffered']
    #allocation6 [shape = 's32[1]{0}', space=sflag, size = 0x4, scoped, tag = 'scoped memory for tpu_custom_call.1']
    #allocation7 [shape = 'u8[4096]{0}', space=vmem, size = 0x1000, scoped, tag = 'output window, operand 0, single buffered']
    %7 = vsyncpa [#allocation3], 0
    %8 = vsyncpa [#allocation6], 0
    %9 = vsyncpa [#allocation4], 0
    // Predicated region
    $region2: #{tpu_custom_call.1} parent=1 // pred_check
      _
    $region3: #{tpu_custom_call.1} parent=1 // pred_check_branch
      %11 = sbr.rel (0) target = $region5
    $region4: #{tpu_custom_call.1} parent=1 // pred_region
      %13 = vsyncadd [#allocation3], 0
      %s15 = sshll.u32 %s0, 4
      %s16 = int_to_ptr.hbm [resolvable:$true] %s15
      %s17 = sshll.u32 [#allocation2], 4
      %s18 = int_to_ptr.vmem [resolvable:$true] %s17
      %20 = dma.hbm_to_vmem [thread:$0]  %s16, 16, %s18, [#allocation3]
    $region5: #{tpu_custom_call.1} parent=1 // pred_fallthru
      _
    // Predicated region
    $region6: #{tpu_custom_call.1} parent=1 // pred_check
      _
    $region7: #{tpu_custom_call.1} parent=1 // pred_check_branch
      %22 = sbr.rel (0) target = $region9
    $region8: #{tpu_custom_call.1} parent=1 // pred_region
      %24 = vsyncadd [#allocation6], 0
      %s26 = sshll.u32 %s1, 4
      %s27 = int_to_ptr.hbm [resolvable:$true] %s26
      %s28 = sshll.u32 [#allocation5], 4
      %s29 = int_to_ptr.vmem [resolvable:$true] %s28
      %31 = dma.hbm_to_vmem [thread:$0]  %s27, 128, %s29, [#allocation6]
    $region9: #{tpu_custom_call.1} parent=1 // pred_fallthru
      _
    // Predicated region
    $region10: #{tpu_custom_call.1} parent=1 // pred_check
      _
    $region11: #{tpu_custom_call.1} parent=1 // pred_check_branch
      %33 = sbr.rel (0) target = $region13
    $region12: #{tpu_custom_call.1} parent=1 // pred_region
      %35 = dma.done [#allocation3], 16
    $region13: #{tpu_custom_call.1} parent=1 // pred_fallthru
      _
    // Predicated region
    $region14: #{tpu_custom_call.1} parent=1 // pred_check
      _
    $region15: #{tpu_custom_call.1} parent=1 // pred_check_branch
      %37 = sbr.rel (0) target = $region17
    $region16: #{tpu_custom_call.1} parent=1 // pred_region
      %39 = dma.done [#allocation6], 128
    $region17: #{tpu_custom_call.1} parent=1 // pred_fallthru
      _
    %v40 = vld [vmem:[#allocation2] sm:$0x1]
    %v41 = vperm.slane %v40, 0
    %v42 = vld [vmem:[#allocation5] sm:$0xff]
    %43 = vset.pattern.permute.xlu0 %v41
    %44 = vperm.xlu0 %43, %v42
    %v45 = vpop.permute.xlu0 %44
    %vm46 = vcmask 261120
    %47 = vst.msk [vmem:[#allocation7] sm:$0xff] %vm46, %v45
    // Predicated region
    $region18: #{tpu_custom_call.1} parent=1 // pred_check
      _
    $region19: #{tpu_custom_call.1} parent=1 // pred_check_branch
      %49 = sbr.rel (0) target = $region21
    $region20: #{tpu_custom_call.1} parent=1 // pred_region
      %51 = vsyncadd [#allocation4], 0
      %s53 = sshll.u32 [#allocation7], 4
      %s54 = int_to_ptr.vmem [resolvable:$true] %s53
      %s55 = sshll.u32 %s2, 4
      %s56 = int_to_ptr.hbm [resolvable:$true] %s55
      %58 = dma.vmem_to_hbm [thread:$0]  %s54, 128, %s56, [#allocation4]
    $region21: #{tpu_custom_call.1} parent=1 // pred_fallthru
      _
    // Predicated region
    $region22: #{tpu_custom_call.1} parent=1 // pred_check
      _
    $region23: #{tpu_custom_call.1} parent=1 // pred_check_branch
      %60 = sbr.rel (0) target = $region25
    $region24: #{tpu_custom_call.1} parent=1 // pred_region
      %62 = dma.done [#allocation4], 128
    $region25: #{tpu_custom_call.1} parent=1 // pred_fallthru
      _
    %63 = vsyncpa [#allocation3], 1
    %64 = vsyncpa [#allocation6], 1
    %65 = vsyncpa [#allocation4], 1

// kernel: tpu_custom_call.1
$region0: #{tpu_custom_call.1}
  #allocation0 [shape = 'u32[]', space=smem, size = 0x4, offset = 0x4, fixed_abs, tag = 'smem constant byte address 0x4 - core index']
  #allocation1 [shape = 'u32[72,128]{1,0:T(1,128)}', space=vmem, size = 0x9000, scoped, tag = 'internal scratch']
  %s0 = inlined_call_operand.hbm [shape: bf16[32,32], index: 0, kind: input, shape index: {}]
  %s1 = inlined_call_operand.hbm [shape: f32[8,32], index: 1, kind: input, shape index: {}]
  %s2 = inlined_call_operand.hbm [shape: f32[8,32], index: 2, kind: output, shape index: {}]
  %s3 = sld [smem:[#allocation0]]
  $region26: #{tpu_custom_call.1} parent=0
    _
  %s5 = ssub.s32 1, %s3
  %s6 = scalar_select 0, %s5, %s3
  $region1: #{tpu_custom_call.1} parent=0
    #allocation2 [shape = 'u8[8192]{0}', space=vmem, size = 0x2000, scoped, tag = 'input window, operand 0, single buffered']
    #allocation3 [shape = 's32[1]{0}', space=sflag, size = 0x4, scoped, tag = 'scoped memory for tpu_custom_call.1']
    #allocation4 [shape = 's32[1]{0}', space=sflag, size = 0x4, scoped, tag = 'scoped memory for tpu_custom_call.1']
    #allocation5 [shape = 'u8[4096]{0}', space=vmem, size = 0x1000, scoped, tag = 'input window, operand 1, single buffered']
    #allocation6 [shape = 's32[1]{0}', space=sflag, size = 0x4, scoped, tag = 'scoped memory for tpu_custom_call.1']
    #allocation7 [shape = 'u8[4096]{0}', space=vmem, size = 0x1000, scoped, tag = 'output window, operand 0, single buffered']
    %7 = vsyncpa [#allocation3], 0
    %8 = vsyncpa [#allocation6], 0
    %9 = vsyncpa [#allocation4], 0
    // Predicated region
    $region2: #{tpu_custom_call.1} parent=1 // pred_check
      _
    $region3: #{tpu_custom_call.1} parent=1 // pred_check_branch
      %11 = sbr.rel (0) target = $region5
    $region4: #{tpu_custom_call.1} parent=1 // pred_region
      %13 = vsyncadd [#allocation3], 0
      %s14 = sshll.u32 %s0, 4
      %s15 = int_to_ptr.hbm [resolvable:$true] %s14
      %s16 = sshll.u32 [#allocation2], 4
      %s17 = int_to_ptr.vmem [resolvable:$true] %s16
      %22 = dma.hbm_to_vmem [thread:$0]  %s15, 256, %s17, [#allocation3], 64, 64, 4
    $region5: #{tpu_custom_call.1} parent=1 // pred_fallthru
      _
    // Predicated region
    $region6: #{tpu_custom_call.1} parent=1 // pred_check
      _
    $region7: #{tpu_custom_call.1} parent=1 // pred_check_branch
      %24 = sbr.rel (0) target = $region9
    $region8: #{tpu_custom_call.1} parent=1 // pred_region
      %26 = vsyncadd [#allocation6], 0
      %s28 = sshll.u32 %s1, 4
      %s29 = int_to_ptr.hbm [resolvable:$true] %s28
      %s30 = sshll.u32 [#allocation5], 4
      %s31 = int_to_ptr.vmem [resolvable:$true] %s30
      %33 = dma.hbm_to_vmem [thread:$0]  %s29, 128, %s31, [#allocation6]
    $region9: #{tpu_custom_call.1} parent=1 // pred_fallthru
      _
    // Predicated region
    $region10: #{tpu_custom_call.1} parent=1 // pred_check
      _
    $region11: #{tpu_custom_call.1} parent=1 // pred_check_branch
      %35 = sbr.rel (0) target = $region13
    $region12: #{tpu_custom_call.1} parent=1 // pred_region
      %37 = dma.done [#allocation3], 256
    $region13: #{tpu_custom_call.1} parent=1 // pred_fallthru
      _
    // Predicated region
    $region14: #{tpu_custom_call.1} parent=1 // pred_check
      _
    $region15: #{tpu_custom_call.1} parent=1 // pred_check_branch
      %39 = sbr.rel (0) target = $region17
    $region16: #{tpu_custom_call.1} parent=1 // pred_region
      %41 = dma.done [#allocation6], 128
    $region17: #{tpu_custom_call.1} parent=1 // pred_fallthru
      _
    %v42 = vld [vmem:[#allocation5] sm:$0xff]
    %v43 = vld [vmem:[#allocation2] sm:$0xf]
    %v44 = vld [vmem:[#allocation2 + $0x4] sm:$0xf]
    %v45 = vld [vmem:[#allocation2 + $0x8] sm:$0xf]
    %v46 = vld [vmem:[#allocation2 + $0xc] sm:$0xf]
    %v47 = vunpack.c.l.bf16 %v43
    %v48 = vunpack.c.l.bf16 %v44
    %v49 = vunpack.c.l.bf16 %v45
    %v50 = vunpack.c.l.bf16 %v46
    %vm51 = vcmask 261120
    %v53 = vsel %vm51, %v42, 0
    %55 = vmatpush.msra.mxu0 0.0
    %56 = vmatpush.msra.mxu0 0.0
    %57 = vmatpush.msra.mxu0 0.0
    %58 = vmatpush.msra.mxu0 0.0
    %59 = vmatpush.msra.mxu0 0.0
    %60 = vmatpush.msra.mxu0 0.0
    %61 = vmatpush.msra.mxu0 0.0
    %62 = vmatpush.msra.mxu0 0.0
    %63 = vmatpush.msra.mxu0 0.0
    %64 = vmatpush.msra.mxu0 0.0
    %65 = vmatpush.msra.mxu0 0.0
    %66 = vmatpush.msra.mxu0 0.0
    %67 = vmatpush.msra.mxu0 %v50
    %68 = vmatpush.msra.mxu0 %v49
    %69 = vmatpush.msra.mxu0 %v48
    %70 = vmatpush.msra.mxu0 %v47
    %71 = vmatmul.f32.gmra.mxu0 %v53
    %v72 = vpop.f32.mrf.mxu0
    %v73 = vadd.f32 0.0, %v72
    %74 = vdwg.mxu0
    %75 = vst.msk [vmem:[#allocation7] sm:$0xff] %vm51, %v73
    // Predicated region
    $region18: #{tpu_custom_call.1} parent=1 // pred_check
      _
    $region19: #{tpu_custom_call.1} parent=1 // pred_check_branch
      %77 = sbr.rel (0) target = $region21
    $region20: #{tpu_custom_call.1} parent=1 // pred_region
      %79 = vsyncadd [#allocation4], 0
      %s81 = sshll.u32 [#allocation7], 4
      %s82 = int_to_ptr.vmem [resolvable:$true] %s81
      %s83 = sshll.u32 %s2, 4
      %s84 = int_to_ptr.hbm [resolvable:$true] %s83
      %86 = dma.vmem_to_hbm [thread:$0]  %s82, 128, %s84, [#allocation4]
    $region21: #{tpu_custom_call.1} parent=1 // pred_fallthru
      _
    // Predicated region
    $region22: #{tpu_custom_call.1} parent=1 // pred_check
      _
    $region23: #{tpu_custom_call.1} parent=1 // pred_check_branch
      %88 = sbr.rel (0) target = $region25
    $region24: #{tpu_custom_call.1} parent=1 // pred_region
      %90 = dma.done [#allocation4], 128
    $region25: #{tpu_custom_call.1} parent=1 // pred_fallthru
      _
    %91 = vsyncpa [#allocation3], 1
    %92 = vsyncpa [#allocation6], 1
    %93 = vsyncpa [#allocation4], 1

</llo_original>
